<compile_context>
chip_gen: v7x
topology: tpu7x:2x2x1
jax: 0.10.0
libtpu: 0.0.40
codegen_flags: <defaults>
</compile_context>

<pallas_src>
import jax
import jax.numpy as jnp
from jax.experimental import pallas as pl
from jax.experimental.pallas import tpu as pltpu

LANE = 128       # TPU lane width: hidden dim padded to this.
SUBLANE = 8      # Head output rows padded to one sublane group.
TM_MAX = 2048    # Max batch columns per grid step.


def _round_up(x, m):
    return (x + m - 1) // m * m


def _value_net_kernel(x_ref, w1_ref, b1_ref, w2_ref, b2_ref,
                      w3_ref, b3_ref, w4_ref, b4_ref, o_ref):
    # Feature-major: columns are batch samples.  Weights are bf16 (out, in);
    # activations are cast to bf16 at each dot; accumulation, bias and ReLU
    # stay f32.
    x = x_ref[...].astype(jnp.bfloat16)                                # (S, TM)
    h = jnp.dot(w1_ref[...], x,
                preferred_element_type=jnp.float32) + b1_ref[...]      # (Hp, TM)
    h = jnp.maximum(h, 0.0)
    h = jnp.dot(w2_ref[...], h.astype(jnp.bfloat16),
                preferred_element_type=jnp.float32) + b2_ref[...]
    h = jnp.maximum(h, 0.0)
    h = jnp.dot(w3_ref[...], h.astype(jnp.bfloat16),
                preferred_element_type=jnp.float32) + b3_ref[...]
    h = jnp.maximum(h, 0.0)
    # Head: (8, Hp) @ (Hp, TM) -> (8, TM); only row 0 is real (rows 1..7 are
    # zero padding).  Store just that row: exact-size, lane-dense writeback.
    out = jnp.dot(w4_ref[...], h.astype(jnp.bfloat16),
                  preferred_element_type=jnp.float32) + b4_ref[...]
    o_ref[...] = out[0:1, :].astype(o_ref.dtype)


def init_value_network_params(key, state_dim, hidden_dim, init_w=0.003):
    """Deterministic init mirroring PyTorch defaults (logical, un-padded).

    linear1..3: U(-1/sqrt(fan_in), 1/sqrt(fan_in))  (nn.Linear default)
    linear4:    U(-init_w, init_w)                  (explicit in __init__)
    Weights stored as (in, out); biases as (1, out).  All f32.
    """
    ks = jax.random.split(key, 8)

    def uinit(k, shape, bound):
        return jax.random.uniform(k, shape, jnp.float32, -bound, bound)

    b1_bound = 1.0 / (state_dim ** 0.5)
    bh_bound = 1.0 / (hidden_dim ** 0.5)
    return {
        "w1": uinit(ks[0], (state_dim, hidden_dim), b1_bound),
        "b1": uinit(ks[1], (1, hidden_dim), b1_bound),
        "w2": uinit(ks[2], (hidden_dim, hidden_dim), bh_bound),
        "b2": uinit(ks[3], (1, hidden_dim), bh_bound),
        "w3": uinit(ks[4], (hidden_dim, hidden_dim), bh_bound),
        "b3": uinit(ks[5], (1, hidden_dim), bh_bound),
        "w4": uinit(ks[6], (hidden_dim, 1), init_w),
        "b4": uinit(ks[7], (1, 1), init_w),
    }


def prepare_params(params):
    """Transpose to (out, in), zero-pad to MXU-friendly shapes, cast weights
    to bf16 (f32 MXU accumulation stays inside the kernel).  Biases stay f32
    as (out_pad, 1) columns for feature-major broadcasting.  Done once,
    outside jit."""
    def w_prep(w, rows_pad, cols_pad):
        wt = jnp.transpose(w)                                    # (out, in)
        wt = jnp.pad(wt, ((0, rows_pad - wt.shape[0]),
                          (0, cols_pad - wt.shape[1])))
        return wt.astype(jnp.bfloat16)

    def b_prep(b, rows_pad):
        bt = jnp.reshape(b, (-1, 1))                             # (out, 1)
        return jnp.pad(bt, ((0, rows_pad - bt.shape[0]), (0, 0))
                       ).astype(jnp.float32)

    state_dim, hidden = params["w1"].shape
    hp = _round_up(hidden, LANE)
    return {
        "w1": w_prep(params["w1"], hp, state_dim),   # (Hp, S)   bf16
        "b1": b_prep(params["b1"], hp),              # (Hp, 1)   f32
        "w2": w_prep(params["w2"], hp, hp),          # (Hp, Hp)  bf16
        "b2": b_prep(params["b2"], hp),
        "w3": w_prep(params["w3"], hp, hp),
        "b3": b_prep(params["b3"], hp),
        "w4": w_prep(params["w4"], SUBLANE, hp),     # (8, Hp)   bf16 (row 0 real)
        "b4": b_prep(params["b4"], SUBLANE),         # (8, 1)    f32  (row 0 real)
    }


@jax.jit
def value_network_forward(state, padded_params):
    """state: (B, state_dim) f32.  padded_params: output of prepare_params."""
    B, state_dim = state.shape
    w1, b1 = padded_params["w1"], padded_params["b1"]
    w2, b2 = padded_params["w2"], padded_params["b2"]
    w3, b3 = padded_params["w3"], padded_params["b3"]
    w4, b4 = padded_params["w4"], padded_params["b4"]
    hp = w1.shape[0]
    ho = w4.shape[0]   # 8: sublane-padded head rows

    # Ragged-batch tiling: split B into `steps` roughly-equal, 128-aligned
    # column tiles (batch sits in the lane dim, so tm must be a multiple of
    # 128).  B=600 -> 1 step of 640 columns, not 1024.
    steps = pl.cdiv(B, TM_MAX)
    tm = _round_up(pl.cdiv(B, steps), LANE)
    b_pad = steps * tm

    # Feature-major input: (state_dim, b_pad).  Padded columns are zeros and
    # their outputs are sliced off below.
    x_t = jnp.transpose(state)
    if b_pad != B:
        x_t = jnp.pad(x_t, ((0, 0), (0, b_pad - B)))

    # Full-extent, grid-invariant blocks for weights/biases (VMEM-resident).
    resident = lambda a: pl.BlockSpec(a.shape, lambda i: (0, 0))

    flops = 2 * b_pad * (state_dim * hp + 2 * hp * hp + ho * hp)
    bytes_accessed = (4 * (b_pad * state_dim + b_pad)                   # x + out (f32)
                      + 2 * (hp * state_dim + 2 * hp * hp + ho * hp)    # bf16 weights
                      + 4 * (3 * hp + ho))                              # f32 biases

    out = pl.pallas_call(
        _value_net_kernel,
        out_shape=jax.ShapeDtypeStruct((1, b_pad), jnp.float32),
        grid=(steps,),
        in_specs=[
            pl.BlockSpec((state_dim, tm), lambda i: (0, i)),   # state column tile
            resident(w1), resident(b1),
            resident(w2), resident(b2),
            resident(w3), resident(b3),
            resident(w4), resident(b4),
        ],
        out_specs=pl.BlockSpec((1, tm), lambda i: (0, i)),     # lane-dense row
        compiler_params=pltpu.CompilerParams(
            dimension_semantics=("parallel",)),
        cost_estimate=pl.CostEstimate(
            flops=flops, transcendentals=0, bytes_accessed=bytes_accessed),
    )(x_t, w1, b1, w2, b2, w3, b3, w4, b4)

    # (1, b_pad) -> (B, 1): exact-size read, no padded-slab re-read.
    return jnp.transpose(out[:, :B])


def value_network_ref(state, params):
    """Pure-JAX f32 reference on the logical (un-padded) params."""
    h = jnp.maximum(state @ params["w1"] + params["b1"], 0.0)
    h = jnp.maximum(h @ params["w2"] + params["b2"], 0.0)
    h = jnp.maximum(h @ params["w3"] + params["b3"], 0.0)
    return h @ params["w4"] + params["b4"]


if __name__ == "__main__":
    key = jax.random.PRNGKey(0)
    k_param, k_state, k_state2 = jax.random.split(key, 3)

    batch = 8
    state_dim = 8
    hidden_dim = 32

    params = init_value_network_params(k_param, state_dim, hidden_dim,
                                       init_w=0.003)
    padded = prepare_params(params)

    # Small demo batch (single grid step).
    state = jax.random.normal(k_state, (batch, state_dim), jnp.float32)
    out = jax.block_until_ready(value_network_forward(state, padded))
    ref = value_network_ref(state, params)
    assert out.shape == (batch, 1), out.shape
    # bf16 matmul inputs (f32 accumulation) -> relaxed tolerance vs f32 ref.
    assert jnp.allclose(out, ref, atol=1e-3, rtol=5e-2), (out, ref)

    # Larger ragged batch: exercises the 128-aligned batch-padding path.
    big = jax.random.normal(k_state2, (600, state_dim), jnp.float32)
    out2 = jax.block_until_ready(value_network_forward(big, padded))
    ref2 = value_network_ref(big, params)
    assert out2.shape == (600, 1), out2.shape
    assert jnp.allclose(out2, ref2, atol=1e-3, rtol=5e-2)

    print("KERNEL_OK")
</pallas_src>

<mosaic_0001>
module attributes {stable_mosaic.version = 11 : i64} {
  func.func @_value_net_kernel(%arg0: i32, %arg1: memref<8x128xf32, #tpu.memory_space<vmem>>, %arg2: memref<128x8xbf16, #tpu.memory_space<vmem>>, %arg3: memref<128x1xf32, #tpu.memory_space<vmem>>, %arg4: memref<128x128xbf16, #tpu.memory_space<vmem>>, %arg5: memref<128x1xf32, #tpu.memory_space<vmem>>, %arg6: memref<128x128xbf16, #tpu.memory_space<vmem>>, %arg7: memref<128x1xf32, #tpu.memory_space<vmem>>, %arg8: memref<8x128xbf16, #tpu.memory_space<vmem>>, %arg9: memref<8x1xf32, #tpu.memory_space<vmem>>, %arg10: memref<1x128xf32, #tpu.memory_space<vmem>>) attributes {dimension_semantics = [#tpu.dimension_semantics<parallel>], iteration_bounds = array<i64: 1>, scalar_prefetch = 0 : i64, scratch_operands = 0 : i64, tpu.core_type = #tpu.core_type<tc>, window_params = [{transform_indices = @transform_0, window_bounds = array<i64: 8, 128>}, {pipeline_mode = #tpu.pipeline_mode<synchronous>, transform_indices = @transform_1, window_bounds = array<i64: 128, 8>}, {pipeline_mode = #tpu.pipeline_mode<synchronous>, transform_indices = @transform_2, window_bounds = array<i64: 128, 1>}, {pipeline_mode = #tpu.pipeline_mode<synchronous>, transform_indices = @transform_3, window_bounds = array<i64: 128, 128>}, {pipeline_mode = #tpu.pipeline_mode<synchronous>, transform_indices = @transform_4, window_bounds = array<i64: 128, 1>}, {pipeline_mode = #tpu.pipeline_mode<synchronous>, transform_indices = @transform_5, window_bounds = array<i64: 128, 128>}, {pipeline_mode = #tpu.pipeline_mode<synchronous>, transform_indices = @transform_6, window_bounds = array<i64: 128, 1>}, {pipeline_mode = #tpu.pipeline_mode<synchronous>, transform_indices = @transform_7, window_bounds = array<i64: 8, 128>}, {pipeline_mode = #tpu.pipeline_mode<synchronous>, transform_indices = @transform_8, window_bounds = array<i64: 8, 1>}, {transform_indices = @transform_9, window_bounds = array<i64: 1, 128>}]} {
    %c0 = arith.constant 0 : index
    %c0_0 = arith.constant 0 : index
    %0 = vector.load %arg1[%c0, %c0_0] : memref<8x128xf32, #tpu.memory_space<vmem>>, vector<8x128xf32>
    %1 = arith.truncf %0 : vector<8x128xf32> to vector<8x128xbf16>
    %c0_1 = arith.constant 0 : index
    %c0_2 = arith.constant 0 : index
    %2 = vector.load %arg2[%c0_1, %c0_2] : memref<128x8xbf16, #tpu.memory_space<vmem>>, vector<128x8xbf16>
    %cst = arith.constant dense<0.000000e+00> : vector<128x128xf32>
    %3 = tpu.matmul %2, %1, %cst {dimension_numbers = #tpu.dot_dimension_numbers<[1], [0], [0], [1], [0, 0, 1, 1], [], []>} : vector<128x8xbf16>, vector<8x128xbf16>, vector<128x128xf32> -> vector<128x128xf32>
    %c0_3 = arith.constant 0 : index
    %c0_4 = arith.constant 0 : index
    %4 = vector.load %arg3[%c0_3, %c0_4] : memref<128x1xf32, #tpu.memory_space<vmem>>, vector<128x1xf32>
    %5 = vector.broadcast %4 : vector<128x1xf32> to vector<128x128xf32>
    %6 = arith.addf %3, %5 : vector<128x128xf32>
    %cst_5 = arith.constant 0.000000e+00 : f32
    %7 = vector.broadcast %cst_5 : f32 to vector<128x128xf32>
    %8 = arith.maximumf %6, %7 : vector<128x128xf32>
    %c0_6 = arith.constant 0 : index
    %c0_7 = arith.constant 0 : index
    %9 = vector.load %arg4[%c0_6, %c0_7] : memref<128x128xbf16, #tpu.memory_space<vmem>>, vector<128x128xbf16>
    %10 = arith.truncf %8 : vector<128x128xf32> to vector<128x128xbf16>
    %cst_8 = arith.constant dense<0.000000e+00> : vector<128x128xf32>
    %11 = tpu.matmul %9, %10, %cst_8 {dimension_numbers = #tpu.dot_dimension_numbers<[1], [0], [0], [1], [0, 0, 1, 1], [], []>} : vector<128x128xbf16>, vector<128x128xbf16>, vector<128x128xf32> -> vector<128x128xf32>
    %c0_9 = arith.constant 0 : index
    %c0_10 = arith.constant 0 : index
    %12 = vector.load %arg5[%c0_9, %c0_10] : memref<128x1xf32, #tpu.memory_space<vmem>>, vector<128x1xf32>
    %13 = vector.broadcast %12 : vector<128x1xf32> to vector<128x128xf32>
    %14 = arith.addf %11, %13 : vector<128x128xf32>
    %cst_11 = arith.constant 0.000000e+00 : f32
    %15 = vector.broadcast %cst_11 : f32 to vector<128x128xf32>
    %16 = arith.maximumf %14, %15 : vector<128x128xf32>
    %c0_12 = arith.constant 0 : index
    %c0_13 = arith.constant 0 : index
    %17 = vector.load %arg6[%c0_12, %c0_13] : memref<128x128xbf16, #tpu.memory_space<vmem>>, vector<128x128xbf16>
    %18 = arith.truncf %16 : vector<128x128xf32> to vector<128x128xbf16>
    %cst_14 = arith.constant dense<0.000000e+00> : vector<128x128xf32>
    %19 = tpu.matmul %17, %18, %cst_14 {dimension_numbers = #tpu.dot_dimension_numbers<[1], [0], [0], [1], [0, 0, 1, 1], [], []>} : vector<128x128xbf16>, vector<128x128xbf16>, vector<128x128xf32> -> vector<128x128xf32>
    %c0_15 = arith.constant 0 : index
    %c0_16 = arith.constant 0 : index
    %20 = vector.load %arg7[%c0_15, %c0_16] : memref<128x1xf32, #tpu.memory_space<vmem>>, vector<128x1xf32>
    %21 = vector.broadcast %20 : vector<128x1xf32> to vector<128x128xf32>
    %22 = arith.addf %19, %21 : vector<128x128xf32>
    %cst_17 = arith.constant 0.000000e+00 : f32
    %23 = vector.broadcast %cst_17 : f32 to vector<128x128xf32>
    %24 = arith.maximumf %22, %23 : vector<128x128xf32>
    %c0_18 = arith.constant 0 : index
    %c0_19 = arith.constant 0 : index
    %25 = vector.load %arg8[%c0_18, %c0_19] : memref<8x128xbf16, #tpu.memory_space<vmem>>, vector<8x128xbf16>
    %26 = arith.truncf %24 : vector<128x128xf32> to vector<128x128xbf16>
    %cst_20 = arith.constant dense<0.000000e+00> : vector<8x128xf32>
    %27 = tpu.matmul %25, %26, %cst_20 {dimension_numbers = #tpu.dot_dimension_numbers<[1], [0], [0], [1], [0, 0, 1, 1], [], []>} : vector<8x128xbf16>, vector<128x128xbf16>, vector<8x128xf32> -> vector<8x128xf32>
    %c0_21 = arith.constant 0 : index
    %c0_22 = arith.constant 0 : index
    %28 = vector.load %arg9[%c0_21, %c0_22] : memref<8x1xf32, #tpu.memory_space<vmem>>, vector<8x1xf32>
    %29 = vector.broadcast %28 : vector<8x1xf32> to vector<8x128xf32>
    %30 = arith.addf %27, %29 : vector<8x128xf32>
    %31 = vector.extract_strided_slice %30 {offsets = [0, 0], sizes = [1, 128], strides = [1, 1]} : vector<8x128xf32> to vector<1x128xf32>
    %c0_23 = arith.constant 0 : index
    %c0_24 = arith.constant 0 : index
    %32 = vector.load %arg10[%c0_23, %c0_24] : memref<1x128xf32, #tpu.memory_space<vmem>>, vector<1x128xf32>
    tpu.vector_store %arg10[%c0_23, %c0_24], %31 {strides = array<i32>} : memref<1x128xf32, #tpu.memory_space<vmem>>, vector<1x128xf32>,
    return
  }
  func.func @transform_0(%arg0: i32) -> (i32, i32) {
    %c0_i32 = arith.constant 0 : i32
    %c0_i32_0 = arith.constant 0 : i32
    return %c0_i32, %arg0 : i32, i32
  }
  func.func @transform_1(%arg0: i32) -> (i32, i32) {
    %c0_i32 = arith.constant 0 : i32
    %c0_i32_0 = arith.constant 0 : i32
    %c0_i32_1 = arith.constant 0 : i32
    return %c0_i32, %c0_i32_0 : i32, i32
  }
  func.func @transform_2(%arg0: i32) -> (i32, i32) {
    %c0_i32 = arith.constant 0 : i32
    %c0_i32_0 = arith.constant 0 : i32
    %c0_i32_1 = arith.constant 0 : i32
    return %c0_i32, %c0_i32_0 : i32, i32
  }
  func.func @transform_3(%arg0: i32) -> (i32, i32) {
    %c0_i32 = arith.constant 0 : i32
    %c0_i32_0 = arith.constant 0 : i32
    %c0_i32_1 = arith.constant 0 : i32
    return %c0_i32, %c0_i32_0 : i32, i32
  }
  func.func @transform_4(%arg0: i32) -> (i32, i32) {
    %c0_i32 = arith.constant 0 : i32
    %c0_i32_0 = arith.constant 0 : i32
    %c0_i32_1 = arith.constant 0 : i32
    return %c0_i32, %c0_i32_0 : i32, i32
  }
  func.func @transform_5(%arg0: i32) -> (i32, i32) {
    %c0_i32 = arith.constant 0 : i32
    %c0_i32_0 = arith.constant 0 : i32
    %c0_i32_1 = arith.constant 0 : i32
    return %c0_i32, %c0_i32_0 : i32, i32
  }
  func.func @transform_6(%arg0: i32) -> (i32, i32) {
    %c0_i32 = arith.constant 0 : i32
    %c0_i32_0 = arith.constant 0 : i32
    %c0_i32_1 = arith.constant 0 : i32
    return %c0_i32, %c0_i32_0 : i32, i32
  }
  func.func @transform_7(%arg0: i32) -> (i32, i32) {
    %c0_i32 = arith.constant 0 : i32
    %c0_i32_0 = arith.constant 0 : i32
    %c0_i32_1 = arith.constant 0 : i32
    return %c0_i32, %c0_i32_0 : i32, i32
  }
  func.func @transform_8(%arg0: i32) -> (i32, i32) {
    %c0_i32 = arith.constant 0 : i32
    %c0_i32_0 = arith.constant 0 : i32
    %c0_i32_1 = arith.constant 0 : i32
    return %c0_i32, %c0_i32_0 : i32, i32
  }
  func.func @transform_9(%arg0: i32) -> (i32, i32) {
    %c0_i32 = arith.constant 0 : i32
    %c0_i32_0 = arith.constant 0 : i32
    return %c0_i32, %arg0 : i32, i32
  }
}

</mosaic_0001>

<llo_original>
// kernel: value_network_forward.1
$region0: #{value_network_forward.1}
  #allocation0 [shape = 'u32[]', space=smem, size = 0x4, offset = 0x4, fixed_abs, tag = 'smem constant byte address 0x4 - core index']
  #allocation1 [shape = 'u32[144,128]{1,0:T(1,128)}', space=vmem, size = 0x12000, scoped, tag = 'internal scratch']
  %s0 = inlined_call_operand.vmem [shape: f32[8,128], index: 0, kind: input, shape index: {}]
  %s1 = inlined_call_operand.vmem [shape: bf16[128,8], index: 1, kind: input, shape index: {}]
  %s2 = inlined_call_operand.vmem [shape: f32[128,1], index: 2, kind: input, shape index: {}]
  %s3 = inlined_call_operand.vmem [shape: bf16[128,128], index: 3, kind: input, shape index: {}]
  %s4 = inlined_call_operand.vmem [shape: f32[128,1], index: 4, kind: input, shape index: {}]
  %s5 = inlined_call_operand.vmem [shape: bf16[128,128], index: 5, kind: input, shape index: {}]
  %s6 = inlined_call_operand.vmem [shape: f32[128,1], index: 6, kind: input, shape index: {}]
  %s7 = inlined_call_operand.vmem [shape: bf16[8,128], index: 7, kind: input, shape index: {}]
  %s8 = inlined_call_operand.vmem [shape: f32[8,1], index: 8, kind: input, shape index: {}]
  %s9 = inlined_call_operand.vmem [shape: f32[1,128], index: 9, kind: output, shape index: {}]
  %s10 = sld [smem:[#allocation0]]
  $region46: #{value_network_forward.1} parent=0
    _
  %s12 = ssub.s32 1, %s10
  %s13 = scalar_select 0, %s12, %s10
  // Predicated region
  $region2: #{value_network_forward.1} parent=0 // pred_check
    _
  $region3: #{value_network_forward.1} parent=0 // pred_check_branch
    %15 = sbr.rel (0) target = $region5
  $region4: #{value_network_forward.1} parent=0 // pred_region
    _
  $region5: #{value_network_forward.1} parent=0 // pred_fallthru
    _
  // Predicated region
  $region6: #{value_network_forward.1} parent=0 // pred_check
    _
  $region7: #{value_network_forward.1} parent=0 // pred_check_branch
    %17 = sbr.rel (0) target = $region9
  $region8: #{value_network_forward.1} parent=0 // pred_region
    _
  $region9: #{value_network_forward.1} parent=0 // pred_fallthru
    _
  // Predicated region
  $region10: #{value_network_forward.1} parent=0 // pred_check
    _
  $region11: #{value_network_forward.1} parent=0 // pred_check_branch
    %19 = sbr.rel (0) target = $region13
  $region12: #{value_network_forward.1} parent=0 // pred_region
    _
  $region13: #{value_network_forward.1} parent=0 // pred_fallthru
    _
  // Predicated region
  $region14: #{value_network_forward.1} parent=0 // pred_check
    _
  $region15: #{value_network_forward.1} parent=0 // pred_check_branch
    %21 = sbr.rel (0) target = $region17
  $region16: #{value_network_forward.1} parent=0 // pred_region
    _
  $region17: #{value_network_forward.1} parent=0 // pred_fallthru
    _
  // Predicated region
  $region18: #{value_network_forward.1} parent=0 // pred_check
    _
  $region19: #{value_network_forward.1} parent=0 // pred_check_branch
    %23 = sbr.rel (0) target = $region21
  $region20: #{value_network_forward.1} parent=0 // pred_region
    _
  $region21: #{value_network_forward.1} parent=0 // pred_fallthru
    _
  // Predicated region
  $region22: #{value_network_forward.1} parent=0 // pred_check
    _
  $region23: #{value_network_forward.1} parent=0 // pred_check_branch
    %25 = sbr.rel (0) target = $region25
  $region24: #{value_network_forward.1} parent=0 // pred_region
    _
  $region25: #{value_network_forward.1} parent=0 // pred_fallthru
    _
  // Predicated region
  $region26: #{value_network_forward.1} parent=0 // pred_check
    _
  $region27: #{value_network_forward.1} parent=0 // pred_check_branch
    %27 = sbr.rel (0) target = $region29
  $region28: #{value_network_forward.1} parent=0 // pred_region
    _
  $region29: #{value_network_forward.1} parent=0 // pred_fallthru
    _
  // Predicated region
  $region30: #{value_network_forward.1} parent=0 // pred_check
    _
  $region31: #{value_network_forward.1} parent=0 // pred_check_branch
    %29 = sbr.rel (0) target = $region33
  $region32: #{value_network_forward.1} parent=0 // pred_region
    _
  $region33: #{value_network_forward.1} parent=0 // pred_fallthru
    _
  // Predicated region
  $region34: #{value_network_forward.1} parent=0 // pred_check
    _
  $region35: #{value_network_forward.1} parent=0 // pred_check_branch
    %31 = sbr.rel (0) target = $region37
  $region36: #{value_network_forward.1} parent=0 // pred_region
    _
  $region37: #{value_network_forward.1} parent=0 // pred_fallthru
    _
  %v33 = vld [vmem:[%s0] sm:$0xff]
  %v34 = vpack.c.bf16 %v33, %v33
  %v35 = vld [vmem:[%s1] sm:$0xf]
  %v36 = vld [vmem:[%s1 + $0x4] sm:$0xf]
  %v37 = vld [vmem:[%s1 + $0x8] sm:$0xf]
  %v38 = vld [vmem:[%s1 + $0xc] sm:$0xf]
  %v39 = vld [vmem:[%s1 + $0x10] sm:$0xf]
  %v40 = vld [vmem:[%s1 + $0x14] sm:$0xf]
  %v41 = vld [vmem:[%s1 + $0x18] sm:$0xf]
  %v42 = vld [vmem:[%s1 + $0x1c] sm:$0xf]
  %v43 = vld [vmem:[%s1 + $0x20] sm:$0xf]
  %v44 = vld [vmem:[%s1 + $0x24] sm:$0xf]
  %v45 = vld [vmem:[%s1 + $0x28] sm:$0xf]
  %v46 = vld [vmem:[%s1 + $0x2c] sm:$0xf]
  %v47 = vld [vmem:[%s1 + $0x30] sm:$0xf]
  %v48 = vld [vmem:[%s1 + $0x34] sm:$0xf]
  %v49 = vld [vmem:[%s1 + $0x38] sm:$0xf]
  %v50 = vld [vmem:[%s1 + $0x3c] sm:$0xf]
  %v51 = vld [vmem:[%s2] sm:$0xff]
  %v52 = vld [vmem:[%s2 + $0x8] sm:$0xff]
  %v53 = vld [vmem:[%s2 + $0x10] sm:$0xff]
  %v54 = vld [vmem:[%s2 + $0x18] sm:$0xff]
  %v55 = vld [vmem:[%s2 + $0x20] sm:$0xff]
  %v56 = vld [vmem:[%s2 + $0x28] sm:$0xff]
  %v57 = vld [vmem:[%s2 + $0x30] sm:$0xff]
  %v58 = vld [vmem:[%s2 + $0x38] sm:$0xff]
  %v59 = vld [vmem:[%s2 + $0x40] sm:$0xff]
  %v60 = vld [vmem:[%s2 + $0x48] sm:$0xff]
  %v61 = vld [vmem:[%s2 + $0x50] sm:$0xff]
  %v62 = vld [vmem:[%s2 + $0x58] sm:$0xff]
  %v63 = vld [vmem:[%s2 + $0x60] sm:$0xff]
  %v64 = vld [vmem:[%s2 + $0x68] sm:$0xff]
  %v65 = vld [vmem:[%s2 + $0x70] sm:$0xff]
  %v66 = vld [vmem:[%s2 + $0x78] sm:$0xff]
  %68 = vset.pattern.permute.xlu0 0
  %69 = vperm.xlu0 %68, %v51
  %v70 = vpop.permute.xlu0 %69
  %73 = vset.pattern.permute.xlu0 0
  %74 = vperm.xlu0 %73, %v52
  %v75 = vpop.permute.xlu0 %74
  %78 = vset.pattern.permute.xlu0 0
  %79 = vperm.xlu0 %78, %v53
  %v80 = vpop.permute.xlu0 %79
  %83 = vset.pattern.permute.xlu0 0
  %84 = vperm.xlu0 %83, %v54
  %v85 = vpop.permute.xlu0 %84
  %88 = vset.pattern.permute.xlu0 0
  %89 = vperm.xlu0 %88, %v55
  %v90 = vpop.permute.xlu0 %89
  %93 = vset.pattern.permute.xlu0 0
  %94 = vperm.xlu0 %93, %v56
  %v95 = vpop.permute.xlu0 %94
  %98 = vset.pattern.permute.xlu0 0
  %99 = vperm.xlu0 %98, %v57
  %v100 = vpop.permute.xlu0 %99
  %103 = vset.pattern.permute.xlu0 0
  %104 = vperm.xlu0 %103, %v58
  %v105 = vpop.permute.xlu0 %104
  %108 = vset.pattern.permute.xlu0 0
  %109 = vperm.xlu0 %108, %v59
  %v110 = vpop.permute.xlu0 %109
  %113 = vset.pattern.permute.xlu0 0
  %114 = vperm.xlu0 %113, %v60
  %v115 = vpop.permute.xlu0 %114
  %118 = vset.pattern.permute.xlu0 0
  %119 = vperm.xlu0 %118, %v61
  %v120 = vpop.permute.xlu0 %119
  %123 = vset.pattern.permute.xlu0 0
  %124 = vperm.xlu0 %123, %v62
  %v125 = vpop.permute.xlu0 %124
  %128 = vset.pattern.permute.xlu0 0
  %129 = vperm.xlu0 %128, %v63
  %v130 = vpop.permute.xlu0 %129
  %133 = vset.pattern.permute.xlu0 0
  %134 = vperm.xlu0 %133, %v64
  %v135 = vpop.permute.xlu0 %134
  %138 = vset.pattern.permute.xlu0 0
  %139 = vperm.xlu0 %138, %v65
  %v140 = vpop.permute.xlu0 %139
  %143 = vset.pattern.permute.xlu0 0
  %144 = vperm.xlu0 %143, %v66
  %v145 = vpop.permute.xlu0 %144
  %v163 = vunpack.c.l.b16 %v35
  %v164 = vunpack.c.l.b16 %v36
  %v165 = vunpack.c.l.b16 %v37
  %v166 = vunpack.c.l.b16 %v38
  %v167 = vunpack.c.l.b16 %v39
  %v168 = vunpack.c.l.b16 %v40
  %v169 = vunpack.c.l.b16 %v41
  %v170 = vunpack.c.l.b16 %v42
  %v171 = vunpack.c.l.b16 %v43
  %v172 = vunpack.c.l.b16 %v44
  %v173 = vunpack.c.l.b16 %v45
  %v174 = vunpack.c.l.b16 %v46
  %v175 = vunpack.c.l.b16 %v47
  %v176 = vunpack.c.l.b16 %v48
  %v177 = vunpack.c.l.b16 %v49
  %v178 = vunpack.c.l.b16 %v50
  %v179 = vpack.c.b16 %v164, %v163
  %v180 = vpack.c.b16 %v166, %v165
  %v181 = vpack.c.b16 %v168, %v167
  %v182 = vpack.c.b16 %v170, %v169
  %v183 = vpack.c.b16 %v172, %v171
  %v184 = vpack.c.b16 %v174, %v173
  %v185 = vpack.c.b16 %v176, %v175
  %v186 = vpack.c.b16 %v178, %v177
  %vm187 = vcmask 64512
  %v189 = vsel %vm187, %v179, 0
  %v192 = vsel %vm187, %v180, 0
  %v195 = vsel %vm187, %v181, 0
  %v198 = vsel %vm187, %v182, 0
  %v201 = vsel %vm187, %v183, 0
  %v204 = vsel %vm187, %v184, 0
  %v207 = vsel %vm187, %v185, 0
  %v210 = vsel %vm187, %v186, 0
  %vm212 = vcmask 1043456
  %v214 = vsel %vm212, %v34, 0
  %216 = vmatprep.subr.bf16.mxu0 0
  %217 = vmatpush1.bf16.msra.mxu0 %v214
  %218 = vmatprep.subr.bf16.mxu0 0
  %219 = vmatpush1.bf16.msra.mxu0 0
  %220 = vmatprep.subr.bf16.mxu0 0
  %221 = vmatpush1.bf16.msra.mxu0 0
  %222 = vmatprep.subr.bf16.mxu0 0
  %223 = vmatpush1.bf16.msra.mxu0 0
  %224 = vmatprep.subr.bf16.mxu0 0
  %225 = vmatpush1.bf16.msra.mxu0 0
  %226 = vmatprep.subr.bf16.mxu0 0
  %227 = vmatpush1.bf16.msra.mxu0 0
  %228 = vmatprep.subr.bf16.mxu0 0
  %229 = vmatpush1.bf16.msra.mxu0 0
  %230 = vmatprep.subr.bf16.mxu0 0
  %231 = vmatpush1.bf16.msra.mxu0 0
  %232 = vmatprep.subr.bf16.mxu0 0
  %233 = vmatpush1.bf16.msra.mxu0 0
  %234 = vmatprep.subr.bf16.mxu0 0
  %235 = vmatpush1.bf16.msra.mxu0 0
  %236 = vmatprep.subr.bf16.mxu0 0
  %237 = vmatpush1.bf16.msra.mxu0 0
  %238 = vmatprep.subr.bf16.mxu0 0
  %239 = vmatpush1.bf16.msra.mxu0 0
  %240 = vmatprep.subr.bf16.mxu0 0
  %241 = vmatpush1.bf16.msra.mxu0 0
  %242 = vmatprep.subr.bf16.mxu0 0
  %243 = vmatpush1.bf16.msra.mxu0 0
  %244 = vmatprep.subr.bf16.mxu0 0
  %245 = vmatpush1.bf16.msra.mxu0 0
  %246 = vmatprep.subr.bf16.mxu0 0
  %247 = vmatpush1.bf16.msra.mxu0 0
  %248 = vmatprep.mubr.bf16.mxu0 0
  %249 = vmatmul.mubr.bf16.gmra.mrb[0].mxu0 %v189
  %v250 = vpop.f32.mrb[0].mxu0
  %v251 = vadd.f32 %v70, %v250
  %v252 = vpop.f32.mrb[0].mxu0
  %v253 = vpop.f32.mrb[0].mxu0
  %v254 = vadd.f32 %v75, %v253
  %v255 = vpop.f32.mrb[0].mxu0
  %256 = vmatprep.mubr.bf16.mxu0 0
  %257 = vmatmul.mubr.bf16.gmra.mrb[0].mxu0 %v192
  %v258 = vpop.f32.mrb[0].mxu0
  %v259 = vadd.f32 %v80, %v258
  %v260 = vpop.f32.mrb[0].mxu0
  %v261 = vpop.f32.mrb[0].mxu0
  %v262 = vadd.f32 %v85, %v261
  %v263 = vpop.f32.mrb[0].mxu0
  %264 = vmatprep.mubr.bf16.mxu0 0
  %265 = vmatmul.mubr.bf16.gmra.mrb[0].mxu0 %v195
  %v266 = vpop.f32.mrb[0].mxu0
  %v267 = vadd.f32 %v90, %v266
  %v268 = vpop.f32.mrb[0].mxu0
  %v269 = vpop.f32.mrb[0].mxu0
  %v270 = vadd.f32 %v95, %v269
  %v271 = vpop.f32.mrb[0].mxu0
  %272 = vmatprep.mubr.bf16.mxu0 0
  %273 = vmatmul.mubr.bf16.gmra.mrb[0].mxu0 %v198
  %v274 = vpop.f32.mrb[0].mxu0
  %v275 = vadd.f32 %v100, %v274
  %v276 = vpop.f32.mrb[0].mxu0
  %v277 = vpop.f32.mrb[0].mxu0
  %v278 = vadd.f32 %v105, %v277
  %v279 = vpop.f32.mrb[0].mxu0
  %280 = vmatprep.mubr.bf16.mxu0 0
  %281 = vmatmul.mubr.bf16.gmra.mrb[0].mxu0 %v201
  %v282 = vpop.f32.mrb[0].mxu0
  %v283 = vadd.f32 %v110, %v282
  %v284 = vpop.f32.mrb[0].mxu0
  %v285 = vpop.f32.mrb[0].mxu0
  %v286 = vadd.f32 %v115, %v285
  %v287 = vpop.f32.mrb[0].mxu0
  %288 = vmatprep.mubr.bf16.mxu0 0
  %289 = vmatmul.mubr.bf16.gmra.mrb[0].mxu0 %v204
  %v290 = vpop.f32.mrb[0].mxu0
  %v291 = vadd.f32 %v120, %v290
  %v292 = vpop.f32.mrb[0].mxu0
  %v293 = vpop.f32.mrb[0].mxu0
  %v294 = vadd.f32 %v125, %v293
  %v295 = vpop.f32.mrb[0].mxu0
  %296 = vmatprep.mubr.bf16.mxu0 0
  %297 = vmatmul.mubr.bf16.gmra.mrb[0].mxu0 %v207
  %v298 = vpop.f32.mrb[0].mxu0
  %v299 = vadd.f32 %v130, %v298
  %v300 = vpop.f32.mrb[0].mxu0
  %v301 = vpop.f32.mrb[0].mxu0
  %v302 = vadd.f32 %v135, %v301
  %v303 = vpop.f32.mrb[0].mxu0
  %304 = vmatprep.mubr.bf16.mxu0 0
  %305 = vmatmul.mubr.bf16.gmra.mrb[0].mxu0 %v210
  %v306 = vpop.f32.mrb[0].mxu0
  %v307 = vadd.f32 %v140, %v306
  %v308 = vpop.f32.mrb[0].mxu0
  %v309 = vpop.f32.mrb[0].mxu0
  %v310 = vadd.f32 %v145, %v309
  %v311 = vpop.f32.mrb[0].mxu0
  %312 = vdwg.mxu0
  %v313 = vmax.f32 %v251, 0.0
  %v314 = vmax.f32 %v254, 0.0
  %v315 = vmax.f32 %v259, 0.0
  %v316 = vmax.f32 %v262, 0.0
  %v317 = vmax.f32 %v267, 0.0
  %v318 = vmax.f32 %v270, 0.0
  %v319 = vmax.f32 %v275, 0.0
  %v320 = vmax.f32 %v278, 0.0
  %v321 = vmax.f32 %v283, 0.0
  %v322 = vmax.f32 %v286, 0.0
  %v323 = vmax.f32 %v291, 0.0
  %v324 = vmax.f32 %v294, 0.0
  %v325 = vmax.f32 %v299, 0.0
  %v326 = vmax.f32 %v302, 0.0
  %v327 = vmax.f32 %v307, 0.0
  %v328 = vmax.f32 %v310, 0.0
  %v329 = vld [vmem:[%s3] sm:$0xf]
  %v330 = vld [vmem:[%s3 + $0x4] sm:$0xf]
  %v331 = vld [vmem:[%s3 + $0x8] sm:$0xf]
  %v332 = vld [vmem:[%s3 + $0xc] sm:$0xf]
  %v333 = vld [vmem:[%s3 + $0x10] sm:$0xf]
  %v334 = vld [vmem:[%s3 + $0x14] sm:$0xf]
  %v335 = vld [vmem:[%s3 + $0x18] sm:$0xf]
  %v336 = vld [vmem:[%s3 + $0x1c] sm:$0xf]
  %v337 = vld [vmem:[%s3 + $0x20] sm:$0xf]
  %v338 = vld [vmem:[%s3 + $0x24] sm:$0xf]
  %v339 = vld [vmem:[%s3 + $0x28] sm:$0xf]
  %v340 = vld [vmem:[%s3 + $0x2c] sm:$0xf]
  %v341 = vld [vmem:[%s3 + $0x30] sm:$0xf]
  %v342 = vld [vmem:[%s3 + $0x34] sm:$0xf]
  %v343 = vld [vmem:[%s3 + $0x38] sm:$0xf]
  %v344 = vld [vmem:[%s3 + $0x3c] sm:$0xf]
  %v345 = vpack.c.bf16 %v314, %v313
  %v346 = vpack.c.bf16 %v316, %v315
  %v347 = vpack.c.bf16 %v318, %v317
  %v348 = vpack.c.bf16 %v320, %v319
  %v349 = vpack.c.bf16 %v322, %v321
  %v350 = vpack.c.bf16 %v324, %v323
  %v351 = vpack.c.bf16 %v326, %v325
  %v352 = vpack.c.bf16 %v328, %v327
  %v353 = vld [vmem:[%s4] sm:$0xff]
  %v354 = vld [vmem:[%s4 + $0x8] sm:$0xff]
  %v355 = vld [vmem:[%s4 + $0x10] sm:$0xff]
  %v356 = vld [vmem:[%s4 + $0x18] sm:$0xff]
  %v357 = vld [vmem:[%s4 + $0x20] sm:$0xff]
  %v358 = vld [vmem:[%s4 + $0x28] sm:$0xff]
  %v359 = vld [vmem:[%s4 + $0x30] sm:$0xff]
  %v360 = vld [vmem:[%s4 + $0x38] sm:$0xff]
  %v361 = vld [vmem:[%s4 + $0x40] sm:$0xff]
  %v362 = vld [vmem:[%s4 + $0x48] sm:$0xff]
  %v363 = vld [vmem:[%s4 + $0x50] sm:$0xff]
  %v364 = vld [vmem:[%s4 + $0x58] sm:$0xff]
  %v365 = vld [vmem:[%s4 + $0x60] sm:$0xff]
  %v366 = vld [vmem:[%s4 + $0x68] sm:$0xff]
  %v367 = vld [vmem:[%s4 + $0x70] sm:$0xff]
  %v368 = vld [vmem:[%s4 + $0x78] sm:$0xff]
  %370 = vset.pattern.permute.xlu0 0
  %371 = vperm.xlu0 %370, %v353
  %v372 = vpop.permute.xlu0 %371
  %375 = vset.pattern.permute.xlu0 0
  %376 = vperm.xlu0 %375, %v354
  %v377 = vpop.permute.xlu0 %376
  %380 = vset.pattern.permute.xlu0 0
  %381 = vperm.xlu0 %380, %v355
  %v382 = vpop.permute.xlu0 %381
  %385 = vset.pattern.permute.xlu0 0
  %386 = vperm.xlu0 %385, %v356
  %v387 = vpop.permute.xlu0 %386
  %390 = vset.pattern.permute.xlu0 0
  %391 = vperm.xlu0 %390, %v357
  %v392 = vpop.permute.xlu0 %391
  %395 = vset.pattern.permute.xlu0 0
  %396 = vperm.xlu0 %395, %v358
  %v397 = vpop.permute.xlu0 %396
  %400 = vset.pattern.permute.xlu0 0
  %401 = vperm.xlu0 %400, %v359
  %v402 = vpop.permute.xlu0 %401
  %405 = vset.pattern.permute.xlu0 0
  %406 = vperm.xlu0 %405, %v360
  %v407 = vpop.permute.xlu0 %406
  %410 = vset.pattern.permute.xlu0 0
  %411 = vperm.xlu0 %410, %v361
  %v412 = vpop.permute.xlu0 %411
  %415 = vset.pattern.permute.xlu0 0
  %416 = vperm.xlu0 %415, %v362
  %v417 = vpop.permute.xlu0 %416
  %420 = vset.pattern.permute.xlu0 0
  %421 = vperm.xlu0 %420, %v363
  %v422 = vpop.permute.xlu0 %421
  %425 = vset.pattern.permute.xlu0 0
  %426 = vperm.xlu0 %425, %v364
  %v427 = vpop.permute.xlu0 %426
  %430 = vset.pattern.permute.xlu0 0
  %431 = vperm.xlu0 %430, %v365
  %v432 = vpop.permute.xlu0 %431
  %435 = vset.pattern.permute.xlu0 0
  %436 = vperm.xlu0 %435, %v366
  %v437 = vpop.permute.xlu0 %436
  %440 = vset.pattern.permute.xlu0 0
  %441 = vperm.xlu0 %440, %v367
  %v442 = vpop.permute.xlu0 %441
  %445 = vset.pattern.permute.xlu0 0
  %446 = vperm.xlu0 %445, %v368
  %v447 = vpop.permute.xlu0 %446
  %v465 = vunpack.c.l.b16 %v329
  %v466 = vunpack.c.l.b16 %v330
  %v467 = vunpack.c.l.b16 %v331
  %v468 = vunpack.c.l.b16 %v332
  %v469 = vunpack.c.l.b16 %v333
  %v470 = vunpack.c.l.b16 %v334
  %v471 = vunpack.c.l.b16 %v335
  %v472 = vunpack.c.l.b16 %v336
  %v473 = vunpack.c.l.b16 %v337
  %v474 = vunpack.c.l.b16 %v338
  %v475 = vunpack.c.l.b16 %v339
  %v476 = vunpack.c.l.b16 %v340
  %v477 = vunpack.c.l.b16 %v341
  %v478 = vunpack.c.l.b16 %v342
  %v479 = vunpack.c.l.b16 %v343
  %v480 = vunpack.c.l.b16 %v344
  %v481 = vpack.c.b16 %v466, %v465
  %v482 = vpack.c.b16 %v468, %v467
  %v483 = vpack.c.b16 %v470, %v469
  %v484 = vpack.c.b16 %v472, %v471
  %v485 = vpack.c.b16 %v474, %v473
  %v486 = vpack.c.b16 %v476, %v475
  %v487 = vpack.c.b16 %v478, %v477
  %v488 = vpack.c.b16 %v480, %v479
  %497 = vmatprep.subr.bf16.mxu0 0
  %498 = vmatpush1.bf16.msra.mxu0 %v345
  %499 = vmatprep.subr.bf16.mxu0 0
  %500 = vmatpush1.bf16.msra.mxu0 %v346
  %501 = vmatprep.subr.bf16.mxu0 0
  %502 = vmatpush1.bf16.msra.mxu0 %v347
  %503 = vmatprep.subr.bf16.mxu0 0
  %504 = vmatpush1.bf16.msra.mxu0 %v348
  %505 = vmatprep.subr.bf16.mxu0 0
  %506 = vmatpush1.bf16.msra.mxu0 %v349
  %507 = vmatprep.subr.bf16.mxu0 0
  %508 = vmatpush1.bf16.msra.mxu0 %v350
  %509 = vmatprep.subr.bf16.mxu0 0
  %510 = vmatpush1.bf16.msra.mxu0 %v351
  %511 = vmatprep.subr.bf16.mxu0 0
  %512 = vmatpush1.bf16.msra.mxu0 %v352
  %513 = vmatprep.subr.bf16.mxu0 0
  %514 = vmatpush1.bf16.msra.mxu0 0
  %515 = vmatprep.subr.bf16.mxu0 0
  %516 = vmatpush1.bf16.msra.mxu0 0
  %517 = vmatprep.subr.bf16.mxu0 0
  %518 = vmatpush1.bf16.msra.mxu0 0
  %519 = vmatprep.subr.bf16.mxu0 0
  %520 = vmatpush1.bf16.msra.mxu0 0
  %521 = vmatprep.subr.bf16.mxu0 0
  %522 = vmatpush1.bf16.msra.mxu0 0
  %523 = vmatprep.subr.bf16.mxu0 0
  %524 = vmatpush1.bf16.msra.mxu0 0
  %525 = vmatprep.subr.bf16.mxu0 0
  %526 = vmatpush1.bf16.msra.mxu0 0
  %527 = vmatprep.subr.bf16.mxu0 0
  %528 = vmatpush1.bf16.msra.mxu0 0
  %529 = vmatprep.mubr.bf16.mxu0 0
  %530 = vmatmul.mubr.bf16.gmra.mrb[0].mxu0 %v481
  %v531 = vpop.f32.mrb[0].mxu0
  %v532 = vadd.f32 %v372, %v531
  %v533 = vpop.f32.mrb[0].mxu0
  %v534 = vpop.f32.mrb[0].mxu0
  %v535 = vadd.f32 %v377, %v534
  %v536 = vpop.f32.mrb[0].mxu0
  %537 = vmatprep.mubr.bf16.mxu0 0
  %538 = vmatmul.mubr.bf16.gmra.mrb[0].mxu0 %v482
  %v539 = vpop.f32.mrb[0].mxu0
  %v540 = vadd.f32 %v382, %v539
  %v541 = vpop.f32.mrb[0].mxu0
  %v542 = vpop.f32.mrb[0].mxu0
  %v543 = vadd.f32 %v387, %v542
  %v544 = vpop.f32.mrb[0].mxu0
  %545 = vmatprep.mubr.bf16.mxu0 0
  %546 = vmatmul.mubr.bf16.gmra.mrb[0].mxu0 %v483
  %v547 = vpop.f32.mrb[0].mxu0
  %v548 = vadd.f32 %v392, %v547
  %v549 = vpop.f32.mrb[0].mxu0
  %v550 = vpop.f32.mrb[0].mxu0
  %v551 = vadd.f32 %v397, %v550
  %v552 = vpop.f32.mrb[0].mxu0
  %553 = vmatprep.mubr.bf16.mxu0 0
  %554 = vmatmul.mubr.bf16.gmra.mrb[0].mxu0 %v484
  %v555 = vpop.f32.mrb[0].mxu0
  %v556 = vadd.f32 %v402, %v555
  %v557 = vpop.f32.mrb[0].mxu0
  %v558 = vpop.f32.mrb[0].mxu0
  %v559 = vadd.f32 %v407, %v558
  %v560 = vpop.f32.mrb[0].mxu0
  %561 = vmatprep.mubr.bf16.mxu0 0
  %562 = vmatmul.mubr.bf16.gmra.mrb[0].mxu0 %v485
  %v563 = vpop.f32.mrb[0].mxu0
  %v564 = vadd.f32 %v412, %v563
  %v565 = vpop.f32.mrb[0].mxu0
  %v566 = vpop.f32.mrb[0].mxu0
  %v567 = vadd.f32 %v417, %v566
  %v568 = vpop.f32.mrb[0].mxu0
  %569 = vmatprep.mubr.bf16.mxu0 0
  %570 = vmatmul.mubr.bf16.gmra.mrb[0].mxu0 %v486
  %v571 = vpop.f32.mrb[0].mxu0
  %v572 = vadd.f32 %v422, %v571
  %v573 = vpop.f32.mrb[0].mxu0
  %v574 = vpop.f32.mrb[0].mxu0
  %v575 = vadd.f32 %v427, %v574
  %v576 = vpop.f32.mrb[0].mxu0
  %577 = vmatprep.mubr.bf16.mxu0 0
  %578 = vmatmul.mubr.bf16.gmra.mrb[0].mxu0 %v487
  %v579 = vpop.f32.mrb[0].mxu0
  %v580 = vadd.f32 %v432, %v579
  %v581 = vpop.f32.mrb[0].mxu0
  %v582 = vpop.f32.mrb[0].mxu0
  %v583 = vadd.f32 %v437, %v582
  %v584 = vpop.f32.mrb[0].mxu0
  %585 = vmatprep.mubr.bf16.mxu0 0
  %586 = vmatmul.mubr.bf16.gmra.mrb[0].mxu0 %v488
  %v587 = vpop.f32.mrb[0].mxu0
  %v588 = vadd.f32 %v442, %v587
  %v589 = vpop.f32.mrb[0].mxu0
  %v590 = vpop.f32.mrb[0].mxu0
  %v591 = vadd.f32 %v447, %v590
  %v592 = vpop.f32.mrb[0].mxu0
  %593 = vdwg.mxu0
  %v594 = vmax.f32 %v532, 0.0
  %v595 = vmax.f32 %v535, 0.0
  %v596 = vmax.f32 %v540, 0.0
  %v597 = vmax.f32 %v543, 0.0
  %v598 = vmax.f32 %v548, 0.0
  %v599 = vmax.f32 %v551, 0.0
  %v600 = vmax.f32 %v556, 0.0
  %v601 = vmax.f32 %v559, 0.0
  %v602 = vmax.f32 %v564, 0.0
  %v603 = vmax.f32 %v567, 0.0
  %v604 = vmax.f32 %v572, 0.0
  %v605 = vmax.f32 %v575, 0.0
  %v606 = vmax.f32 %v580, 0.0
  %v607 = vmax.f32 %v583, 0.0
  %v608 = vmax.f32 %v588, 0.0
  %v609 = vmax.f32 %v591, 0.0
  %v610 = vld [vmem:[%s5] sm:$0xf]
  %v611 = vld [vmem:[%s5 + $0x4] sm:$0xf]
  %v612 = vld [vmem:[%s5 + $0x8] sm:$0xf]
  %v613 = vld [vmem:[%s5 + $0xc] sm:$0xf]
  %v614 = vld [vmem:[%s5 + $0x10] sm:$0xf]
  %v615 = vld [vmem:[%s5 + $0x14] sm:$0xf]
  %v616 = vld [vmem:[%s5 + $0x18] sm:$0xf]
  %v617 = vld [vmem:[%s5 + $0x1c] sm:$0xf]
  %v618 = vld [vmem:[%s5 + $0x20] sm:$0xf]
  %v619 = vld [vmem:[%s5 + $0x24] sm:$0xf]
  %v620 = vld [vmem:[%s5 + $0x28] sm:$0xf]
  %v621 = vld [vmem:[%s5 + $0x2c] sm:$0xf]
  %v622 = vld [vmem:[%s5 + $0x30] sm:$0xf]
  %v623 = vld [vmem:[%s5 + $0x34] sm:$0xf]
  %v624 = vld [vmem:[%s5 + $0x38] sm:$0xf]
  %v625 = vld [vmem:[%s5 + $0x3c] sm:$0xf]
  %v626 = vpack.c.bf16 %v595, %v594
  %v627 = vpack.c.bf16 %v597, %v596
  %v628 = vpack.c.bf16 %v599, %v598
  %v629 = vpack.c.bf16 %v601, %v600
  %v630 = vpack.c.bf16 %v603, %v602
  %v631 = vpack.c.bf16 %v605, %v604
  %v632 = vpack.c.bf16 %v607, %v606
  %v633 = vpack.c.bf16 %v609, %v608
  %v634 = vld [vmem:[%s6] sm:$0xff]
  %v635 = vld [vmem:[%s6 + $0x8] sm:$0xff]
  %v636 = vld [vmem:[%s6 + $0x10] sm:$0xff]
  %v637 = vld [vmem:[%s6 + $0x18] sm:$0xff]
  %v638 = vld [vmem:[%s6 + $0x20] sm:$0xff]
  %v639 = vld [vmem:[%s6 + $0x28] sm:$0xff]
  %v640 = vld [vmem:[%s6 + $0x30] sm:$0xff]
  %v641 = vld [vmem:[%s6 + $0x38] sm:$0xff]
  %v642 = vld [vmem:[%s6 + $0x40] sm:$0xff]
  %v643 = vld [vmem:[%s6 + $0x48] sm:$0xff]
  %v644 = vld [vmem:[%s6 + $0x50] sm:$0xff]
  %v645 = vld [vmem:[%s6 + $0x58] sm:$0xff]
  %v646 = vld [vmem:[%s6 + $0x60] sm:$0xff]
  %v647 = vld [vmem:[%s6 + $0x68] sm:$0xff]
  %v648 = vld [vmem:[%s6 + $0x70] sm:$0xff]
  %v649 = vld [vmem:[%s6 + $0x78] sm:$0xff]
  %651 = vset.pattern.permute.xlu0 0
  %652 = vperm.xlu0 %651, %v634
  %v653 = vpop.permute.xlu0 %652
  %656 = vset.pattern.permute.xlu0 0
  %657 = vperm.xlu0 %656, %v635
  %v658 = vpop.permute.xlu0 %657
  %661 = vset.pattern.permute.xlu0 0
  %662 = vperm.xlu0 %661, %v636
  %v663 = vpop.permute.xlu0 %662
  %666 = vset.pattern.permute.xlu0 0
  %667 = vperm.xlu0 %666, %v637
  %v668 = vpop.permute.xlu0 %667
  %671 = vset.pattern.permute.xlu0 0
  %672 = vperm.xlu0 %671, %v638
  %v673 = vpop.permute.xlu0 %672
  %676 = vset.pattern.permute.xlu0 0
  %677 = vperm.xlu0 %676, %v639
  %v678 = vpop.permute.xlu0 %677
  %681 = vset.pattern.permute.xlu0 0
  %682 = vperm.xlu0 %681, %v640
  %v683 = vpop.permute.xlu0 %682
  %686 = vset.pattern.permute.xlu0 0
  %687 = vperm.xlu0 %686, %v641
  %v688 = vpop.permute.xlu0 %687
  %691 = vset.pattern.permute.xlu0 0
  %692 = vperm.xlu0 %691, %v642
  %v693 = vpop.permute.xlu0 %692
  %696 = vset.pattern.permute.xlu0 0
  %697 = vperm.xlu0 %696, %v643
  %v698 = vpop.permute.xlu0 %697
  %701 = vset.pattern.permute.xlu0 0
  %702 = vperm.xlu0 %701, %v644
  %v703 = vpop.permute.xlu0 %702
  %706 = vset.pattern.permute.xlu0 0
  %707 = vperm.xlu0 %706, %v645
  %v708 = vpop.permute.xlu0 %707
  %711 = vset.pattern.permute.xlu0 0
  %712 = vperm.xlu0 %711, %v646
  %v713 = vpop.permute.xlu0 %712
  %716 = vset.pattern.permute.xlu0 0
  %717 = vperm.xlu0 %716, %v647
  %v718 = vpop.permute.xlu0 %717
  %721 = vset.pattern.permute.xlu0 0
  %722 = vperm.xlu0 %721, %v648
  %v723 = vpop.permute.xlu0 %722
  %726 = vset.pattern.permute.xlu0 0
  %727 = vperm.xlu0 %726, %v649
  %v728 = vpop.permute.xlu0 %727
  %v746 = vunpack.c.l.b16 %v610
  %v747 = vunpack.c.l.b16 %v611
  %v748 = vunpack.c.l.b16 %v612
  %v749 = vunpack.c.l.b16 %v613
  %v750 = vunpack.c.l.b16 %v614
  %v751 = vunpack.c.l.b16 %v615
  %v752 = vunpack.c.l.b16 %v616
  %v753 = vunpack.c.l.b16 %v617
  %v754 = vunpack.c.l.b16 %v618
  %v755 = vunpack.c.l.b16 %v619
  %v756 = vunpack.c.l.b16 %v620
  %v757 = vunpack.c.l.b16 %v621
  %v758 = vunpack.c.l.b16 %v622
  %v759 = vunpack.c.l.b16 %v623
  %v760 = vunpack.c.l.b16 %v624
  %v761 = vunpack.c.l.b16 %v625
  %v762 = vpack.c.b16 %v747, %v746
  %v763 = vpack.c.b16 %v749, %v748
  %v764 = vpack.c.b16 %v751, %v750
  %v765 = vpack.c.b16 %v753, %v752
  %v766 = vpack.c.b16 %v755, %v754
  %v767 = vpack.c.b16 %v757, %v756
  %v768 = vpack.c.b16 %v759, %v758
  %v769 = vpack.c.b16 %v761, %v760
  %778 = vmatprep.subr.bf16.mxu0 0
  %779 = vmatpush1.bf16.msra.mxu0 %v626
  %780 = vmatprep.subr.bf16.mxu0 0
  %781 = vmatpush1.bf16.msra.mxu0 %v627
  %782 = vmatprep.subr.bf16.mxu0 0
  %783 = vmatpush1.bf16.msra.mxu0 %v628
  %784 = vmatprep.subr.bf16.mxu0 0
  %785 = vmatpush1.bf16.msra.mxu0 %v629
  %786 = vmatprep.subr.bf16.mxu0 0
  %787 = vmatpush1.bf16.msra.mxu0 %v630
  %788 = vmatprep.subr.bf16.mxu0 0
  %789 = vmatpush1.bf16.msra.mxu0 %v631
  %790 = vmatprep.subr.bf16.mxu0 0
  %791 = vmatpush1.bf16.msra.mxu0 %v632
  %792 = vmatprep.subr.bf16.mxu0 0
  %793 = vmatpush1.bf16.msra.mxu0 %v633
  %794 = vmatprep.subr.bf16.mxu0 0
  %795 = vmatpush1.bf16.msra.mxu0 0
  %796 = vmatprep.subr.bf16.mxu0 0
  %797 = vmatpush1.bf16.msra.mxu0 0
  %798 = vmatprep.subr.bf16.mxu0 0
  %799 = vmatpush1.bf16.msra.mxu0 0
  %800 = vmatprep.subr.bf16.mxu0 0
  %801 = vmatpush1.bf16.msra.mxu0 0
  %802 = vmatprep.subr.bf16.mxu0 0
  %803 = vmatpush1.bf16.msra.mxu0 0
  %804 = vmatprep.subr.bf16.mxu0 0
  %805 = vmatpush1.bf16.msra.mxu0 0
  %806 = vmatprep.subr.bf16.mxu0 0
  %807 = vmatpush1.bf16.msra.mxu0 0
  %808 = vmatprep.subr.bf16.mxu0 0
  %809 = vmatpush1.bf16.msra.mxu0 0
  %810 = vmatprep.mubr.bf16.mxu0 0
  %811 = vmatmul.mubr.bf16.gmra.mrb[0].mxu0 %v762
  %v812 = vpop.f32.mrb[0].mxu0
  %v813 = vadd.f32 %v653, %v812
  %v814 = vpop.f32.mrb[0].mxu0
  %v815 = vpop.f32.mrb[0].mxu0
  %v816 = vadd.f32 %v658, %v815
  %v817 = vpop.f32.mrb[0].mxu0
  %818 = vmatprep.mubr.bf16.mxu0 0
  %819 = vmatmul.mubr.bf16.gmra.mrb[0].mxu0 %v763
  %v820 = vpop.f32.mrb[0].mxu0
  %v821 = vadd.f32 %v663, %v820
  %v822 = vpop.f32.mrb[0].mxu0
  %v823 = vpop.f32.mrb[0].mxu0
  %v824 = vadd.f32 %v668, %v823
  %v825 = vpop.f32.mrb[0].mxu0
  %826 = vmatprep.mubr.bf16.mxu0 0
  %827 = vmatmul.mubr.bf16.gmra.mrb[0].mxu0 %v764
  %v828 = vpop.f32.mrb[0].mxu0
  %v829 = vadd.f32 %v673, %v828
  %v830 = vpop.f32.mrb[0].mxu0
  %v831 = vpop.f32.mrb[0].mxu0
  %v832 = vadd.f32 %v678, %v831
  %v833 = vpop.f32.mrb[0].mxu0
  %834 = vmatprep.mubr.bf16.mxu0 0
  %835 = vmatmul.mubr.bf16.gmra.mrb[0].mxu0 %v765
  %v836 = vpop.f32.mrb[0].mxu0
  %v837 = vadd.f32 %v683, %v836
  %v838 = vpop.f32.mrb[0].mxu0
  %v839 = vpop.f32.mrb[0].mxu0
  %v840 = vadd.f32 %v688, %v839
  %v841 = vpop.f32.mrb[0].mxu0
  %842 = vmatprep.mubr.bf16.mxu0 0
  %843 = vmatmul.mubr.bf16.gmra.mrb[0].mxu0 %v766
  %v844 = vpop.f32.mrb[0].mxu0
  %v845 = vadd.f32 %v693, %v844
  %v846 = vpop.f32.mrb[0].mxu0
  %v847 = vpop.f32.mrb[0].mxu0
  %v848 = vadd.f32 %v698, %v847
  %v849 = vpop.f32.mrb[0].mxu0
  %850 = vmatprep.mubr.bf16.mxu0 0
  %851 = vmatmul.mubr.bf16.gmra.mrb[0].mxu0 %v767
  %v852 = vpop.f32.mrb[0].mxu0
  %v853 = vadd.f32 %v703, %v852
  %v854 = vpop.f32.mrb[0].mxu0
  %v855 = vpop.f32.mrb[0].mxu0
  %v856 = vadd.f32 %v708, %v855
  %v857 = vpop.f32.mrb[0].mxu0
  %858 = vmatprep.mubr.bf16.mxu0 0
  %859 = vmatmul.mubr.bf16.gmra.mrb[0].mxu0 %v768
  %v860 = vpop.f32.mrb[0].mxu0
  %v861 = vadd.f32 %v713, %v860
  %v862 = vpop.f32.mrb[0].mxu0
  %v863 = vpop.f32.mrb[0].mxu0
  %v864 = vadd.f32 %v718, %v863
  %v865 = vpop.f32.mrb[0].mxu0
  %866 = vmatprep.mubr.bf16.mxu0 0
  %867 = vmatmul.mubr.bf16.gmra.mrb[0].mxu0 %v769
  %v868 = vpop.f32.mrb[0].mxu0
  %v869 = vadd.f32 %v723, %v868
  %v870 = vpop.f32.mrb[0].mxu0
  %v871 = vpop.f32.mrb[0].mxu0
  %v872 = vadd.f32 %v728, %v871
  %v873 = vpop.f32.mrb[0].mxu0
  %874 = vdwg.mxu0
  %v875 = vmax.f32 %v813, 0.0
  %v876 = vmax.f32 %v816, 0.0
  %v877 = vmax.f32 %v821, 0.0
  %v878 = vmax.f32 %v824, 0.0
  %v879 = vmax.f32 %v829, 0.0
  %v880 = vmax.f32 %v832, 0.0
  %v881 = vmax.f32 %v837, 0.0
  %v882 = vmax.f32 %v840, 0.0
  %v883 = vmax.f32 %v845, 0.0
  %v884 = vmax.f32 %v848, 0.0
  %v885 = vmax.f32 %v853, 0.0
  %v886 = vmax.f32 %v856, 0.0
  %v887 = vmax.f32 %v861, 0.0
  %v888 = vmax.f32 %v864, 0.0
  %v889 = vmax.f32 %v869, 0.0
  %v890 = vmax.f32 %v872, 0.0
  %v891 = vld [vmem:[%s7] sm:$0xf]
  %v892 = vpack.c.bf16 %v876, %v875
  %v893 = vpack.c.bf16 %v878, %v877
  %v894 = vpack.c.bf16 %v880, %v879
  %v895 = vpack.c.bf16 %v882, %v881
  %v896 = vpack.c.bf16 %v884, %v883
  %v897 = vpack.c.bf16 %v886, %v885
  %v898 = vpack.c.bf16 %v888, %v887
  %v899 = vpack.c.bf16 %v890, %v889
  %v900 = vld [vmem:[%s8] sm:$0xff]
  %902 = vset.pattern.permute.xlu0 0
  %903 = vperm.xlu0 %902, %v900
  %v904 = vpop.permute.xlu0 %903
  %906 = vmatprep.subr.bf16.mxu0 0
  %907 = vmatpush1.bf16.msra.mxu0 %v892
  %908 = vmatprep.subr.bf16.mxu0 0
  %909 = vmatpush1.bf16.msra.mxu0 %v893
  %910 = vmatprep.subr.bf16.mxu0 0
  %911 = vmatpush1.bf16.msra.mxu0 %v894
  %912 = vmatprep.subr.bf16.mxu0 0
  %913 = vmatpush1.bf16.msra.mxu0 %v895
  %914 = vmatprep.subr.bf16.mxu0 0
  %915 = vmatpush1.bf16.msra.mxu0 %v896
  %916 = vmatprep.subr.bf16.mxu0 0
  %917 = vmatpush1.bf16.msra.mxu0 %v897
  %918 = vmatprep.subr.bf16.mxu0 0
  %919 = vmatpush1.bf16.msra.mxu0 %v898
  %920 = vmatprep.subr.bf16.mxu0 0
  %921 = vmatpush1.bf16.msra.mxu0 %v899
  %922 = vmatprep.subr.bf16.mxu0 0
  %923 = vmatpush1.bf16.msra.mxu0 0
  %924 = vmatprep.subr.bf16.mxu0 0
  %925 = vmatpush1.bf16.msra.mxu0 0
  %926 = vmatprep.subr.bf16.mxu0 0
  %927 = vmatpush1.bf16.msra.mxu0 0
  %928 = vmatprep.subr.bf16.mxu0 0
  %929 = vmatpush1.bf16.msra.mxu0 0
  %930 = vmatprep.subr.bf16.mxu0 0
  %931 = vmatpush1.bf16.msra.mxu0 0
  %932 = vmatprep.subr.bf16.mxu0 0
  %933 = vmatpush1.bf16.msra.mxu0 0
  %934 = vmatprep.subr.bf16.mxu0 0
  %935 = vmatpush1.bf16.msra.mxu0 0
  %936 = vmatprep.subr.bf16.mxu0 0
  %937 = vmatpush1.bf16.msra.mxu0 0
  %938 = vmatprep.mubr.bf16.mxu0 0
  %939 = vmatmul.mubr.bf16.gmra.mrb[0].mxu0 %v891
  %v940 = vpop.f32.mrb[0].mxu0
  %v941 = vadd.f32 %v904, %v940
  %v942 = vpop.f32.mrb[0].mxu0
  %v943 = vpop.f32.mrb[0].mxu0
  %v944 = vpop.f32.mrb[0].mxu0
  %945 = vdwg.mxu0
  %946 = vst [vmem:[%s9] sm:$0x1] %v941
  // Predicated region
  $region38: #{value_network_forward.1} parent=0 // pred_check
    _
  $region39: #{value_network_forward.1} parent=0 // pred_check_branch
    %948 = sbr.rel (0) target = $region41
  $region40: #{value_network_forward.1} parent=0 // pred_region
    _
  $region41: #{value_network_forward.1} parent=0 // pred_fallthru
    _
  // Predicated region
  $region42: #{value_network_forward.1} parent=0 // pred_check
    _
  $region43: #{value_network_forward.1} parent=0 // pred_check_branch
    %950 = sbr.rel (0) target = $region45
  $region44: #{value_network_forward.1} parent=0 // pred_region
    _
  $region45: #{value_network_forward.1} parent=0 // pred_fallthru
    _

</llo_original>
